<compile_context>
chip_gen: v5e
topology: v5e:2x2
jax: 0.10.0
libtpu: 0.0.40
codegen_flags: <defaults>
</compile_context>

<pallas_src>
import jax
import jax.numpy as jnp
from jax.experimental import pallas as pl
from jax.experimental.pallas import tpu as pltpu

_NEG = -1e30  # finite "minus infinity": exp(_NEG - m) underflows to exactly 0.0


def _round_up(x, m):
    return ((x + m - 1) // m) * m


def _cdiv(a, b):
    return -(-a // b)


def _make_kernel(has_align, s_tail):
    """Build the kernel body with static config (alignment mode, ragged-S handling)."""

    def kernel(q_ref, ctx_ref, mask_ref, *rest):
        if has_align:
            wa_ref, wcat_ref, out_ref, q_scr, m_scr, l_scr, acc_scr = rest
        else:
            wcat_ref, out_ref, q_scr, m_scr, l_scr, acc_scr = rest

        s_idx = pl.program_id(1)

        # ---- per-batch-tile init (first S step) ------------------------------
        @pl.when(s_idx == 0)
        def _init():
            if has_align:
                # q = query @ W_align^T (weight pre-transposed -> plain MXU matmul)
                q_scr[...] = jnp.dot(q_ref[...], wa_ref[...],
                                     preferred_element_type=jnp.float32)
            else:
                q_scr[...] = q_ref[...].astype(jnp.float32)
            m_scr[...] = jnp.full_like(m_scr, _NEG)
            l_scr[...] = jnp.zeros_like(l_scr)
            acc_scr[...] = jnp.zeros_like(acc_scr)

        # Context stays in its streaming dtype (no full f32 tile copy).
        ctx = ctx_ref[...]                                   # (TS, TB, D)
        mask = mask_ref[0]                                   # (TS, TB) int32
        if s_tail:
            # Last sequence tile overhangs S in HBM: the out-of-bounds rows hold
            # stale VMEM data.  Zero-select every masked position (padding + user
            # mask) so 0 * garbage can never produce NaN in the contributions.
            ctx = jnp.where((mask == 0)[:, :, None], ctx, 0)

        # align[s, b] = sum_d ctx[s, b, d] * q[b, d]  (f32 accumulation).
        # TODO(synk): on v7x (VALU/XLU-bound regime) move this cross-lane
        # contraction onto the idle MXU; on HBM-bound v5e/v6e it is hidden.
        qc = q_scr[...].astype(ctx.dtype)                    # (TB, D)
        align = jnp.sum(ctx * qc[None, :, :], axis=-1, dtype=jnp.float32)  # (TS, TB)
        align = jnp.where(mask != 0, _NEG, align)

        # ---- online softmax update -------------------------------------------
        m_prev = m_scr[...]                                  # (1, TB)
        m_new = jnp.maximum(m_prev, jnp.max(align, axis=0, keepdims=True))
        alpha = jnp.exp(m_prev - m_new)                      # (1, TB)
        p = jnp.exp(align - m_new)                           # (TS, TB) f32

        m_scr[...] = m_new
        l_scr[...] = alpha * l_scr[...] + jnp.sum(p, axis=0, keepdims=True)

        # contrib[b, d] = sum_s p[s, b] * ctx[s, b, d]   (f32 accumulation).
        pc = p.astype(ctx.dtype)
        contrib = jnp.sum(pc[:, :, None] * ctx, axis=0, dtype=jnp.float32)  # (TB, D)

        # Per-row rescale of the accumulator: small broadcast multiply (b moves
        # lanes -> sublanes once per step) instead of a diagonal MXU matmul.
        acc_scr[...] = (alpha[:, :, None] * acc_scr[...])[0] + contrib

        # ---- finalize (last S step) -------------------------------------------
        @pl.when(s_idx == pl.num_programs(1) - 1)
        def _finalize():
            l = l_scr[...]                                   # (1, TB)
            inv_l = pl.reciprocal(l, approx=True)            # EUP
            inv_l = inv_l * (2.0 - l * inv_l)                # one Newton step
            wctx = (inv_l[:, :, None] * acc_scr[...])[0]     # (TB, D)
            query = q_ref[...].astype(jnp.float32)
            xy = jnp.concatenate([wctx, query], axis=1)      # (TB, 2D)
            out = jnp.tanh(jnp.dot(xy.astype(wcat_ref.dtype), wcat_ref[...],
                                   preferred_element_type=jnp.float32))
            out_ref[...] = out.astype(out_ref.dtype)

    return kernel


def global_attention(query, context, mask, w_align, w_context, w_query,
                     *, alignment_function="general",
                     block_b=32, block_s=None, vmem_limit_bytes=None):
    """Luong global attention.

    query: (B, D); context: (S, B, D) (PyTorch layout); mask: (B, S), nonzero = masked.
    Weights are nn.Linear weights in PyTorch (out_features, in_features) layout.
    For HBM-bound chips (v5e/v6e) stream `context`/`query` (and weights) as bf16 at
    the producer -- the kernel keeps softmax statistics / accumulation in f32.
    """
    B, D = query.shape
    S = context.shape[0]
    assert context.shape == (S, B, D)
    out_dtype = query.dtype

    if alignment_function not in ("general", "dot"):
        raise ValueError("Invalid alignment function: {}".format(alignment_function))
    has_align = alignment_function == "general"

    # ---- weights: (out, in) -> (in, out), output projections fused; dtype follows stream
    w_dtype = context.dtype

    def _prep(w):
        return jnp.asarray(w).T.astype(w_dtype)

    wcat = jnp.concatenate([_prep(w_context), _prep(w_query)], axis=0)   # (2D, D)
    wa_t = _prep(w_align) if has_align else None

    # ---- batch tiling: TB multiple of 8 (or == B); keep >=2 batch tiles (megacore)
    if B <= 8:
        # TODO(synk): for decode-style B<=8 on v7x, split the S reduction across the
        # two TensorCores (per-core partial m/l/acc + combine) instead of idling one.
        TB = B
    else:
        TB = min(max(8, (block_b // 8) * 8), _round_up(B, 8))
        while TB > 8 and _cdiv(B, TB) < 2:
            TB -= 8
    n_b = _cdiv(B, TB)

    # ---- chip-aware VMEM budget ------------------------------------------------
    if vmem_limit_bytes is None:
        try:
            cap = int(pltpu.get_tpu_info().vmem_capacity_bytes)
        except Exception:
            cap = 64 * 1024 * 1024                      # v7x floor
        vmem_limit_bytes = (cap * 3) // 4               # headroom for Mosaic scratch
    vmem_limit_bytes = int(vmem_limit_bytes)

    ctx_item = jnp.dtype(context.dtype).itemsize
    w_item = jnp.dtype(w_dtype).itemsize
    q_item = jnp.dtype(query.dtype).itemsize
    o_item = jnp.dtype(out_dtype).itemsize
    weight_bytes = (D * D * w_item if has_align else 0) + 2 * D * D * w_item
    # TODO(synk): single-buffer the resident weights (pipeline_mode=pl.Buffered(1))
    # to halve the 2x below once that path is validated on the target jax version.
    fixed = 2 * weight_bytes                            # double-buffered resident weights
    fixed += 2 * TB * D * (q_item + o_item)             # query / output blocks
    fixed += 2 * TB * D * 4 + 2 * 8 * 128 * 4           # f32 scratch (q, acc) + stats tiles
    reserve = 4 * 1024 * 1024
    # per-S-row: 2x double-buffered ctx block + f32 intermediate allowance + mask.
    per_row = TB * D * (2 * ctx_item + 4) + 2 * TB * 4

    if block_s is None:
        avail = vmem_limit_bytes - fixed - reserve
        ts_target = int(max(8, min(4096, avail // per_row)))
    else:
        ts_target = int(max(1, block_s))

    # ---- sequence tiling: never pads the (S, B, D) stream in HBM ----------------
    if S <= ts_target:
        TS, s_tail = S, False
    else:
        ts_target = max(8, (ts_target // 8) * 8)
        best = 0
        for t in range(ts_target, 7, -8):               # largest mult-of-8 divisor of S
            if S % t == 0:
                best = t
                break
        if best >= max(8, ts_target // 2):
            TS, s_tail = best, False
        else:
            TS, s_tail = ts_target, True                # last tile overhangs; kernel masks it
    n_s = _cdiv(S, TS)

    # ---- mask: tiny, so pad/reshape freely to the kernel's (TS, TB) orientation --
    S_m, B_m = n_s * TS, n_b * TB
    if mask is None:
        mask_i = jnp.zeros((B, S), jnp.int32)
    else:
        mask_i = (jnp.asarray(mask) != 0).astype(jnp.int32)
    mask_sb = jnp.ones((S_m, B_m), jnp.int32).at[:S, :B].set(mask_i.T)
    mask_r = mask_sb.reshape(S_m, n_b, TB).transpose(1, 0, 2)     # (n_b, S_m, TB)

    in_specs = [
        pl.BlockSpec((TB, D), lambda b, s: (b, 0)),               # query (no pad)
        pl.BlockSpec((TS, TB, D), lambda b, s: (s, b, 0)),        # context, native (S,B,D)
        pl.BlockSpec((1, TS, TB), lambda b, s: (b, s, 0)),        # mask tile
    ]
    inputs = [query, context, mask_r]
    if has_align:
        in_specs.append(pl.BlockSpec((D, D), lambda b, s: (0, 0)))        # W_align^T (resident)
        inputs.append(wa_t)
    in_specs.append(pl.BlockSpec((2 * D, D), lambda b, s: (0, 0)))        # [W_ctx^T ; W_qry^T]
    inputs.append(wcat)

    kernel = _make_kernel(has_align, s_tail)

    return pl.pallas_call(
        kernel,
        out_shape=jax.ShapeDtypeStruct((B, D), out_dtype),
        grid_spec=pltpu.PrefetchScalarGridSpec(
            num_scalar_prefetch=0,
            grid=(n_b, n_s),                                      # (parallel, reduction)
            in_specs=in_specs,
            out_specs=pl.BlockSpec((TB, D), lambda b, s: (b, 0)),
            scratch_shapes=[
                pltpu.VMEM((TB, D), jnp.float32),   # q = query @ W_align^T
                pltpu.VMEM((1, TB), jnp.float32),   # running max  m
                pltpu.VMEM((1, TB), jnp.float32),   # running sum  l
                pltpu.VMEM((TB, D), jnp.float32),   # running weighted context
            ],
        ),
        compiler_params=pltpu.CompilerParams(
            dimension_semantics=("parallel", "arbitrary"),
            vmem_limit_bytes=vmem_limit_bytes),
    )(*inputs)


def _reference(query, context, mask, w_align, w_context, w_query,
               alignment_function="general"):
    """Pure-JAX reference mirroring the PyTorch forward."""
    context_t = jnp.transpose(context, (1, 0, 2))               # (B, S, D)
    q = query if alignment_function == "dot" else query @ w_align.T
    align = jnp.einsum('bsd,bd->bs', context_t, q)              # (B, S)
    if mask is not None:
        align = jnp.where(mask != 0, -jnp.inf, align)
    attn = jax.nn.softmax(align, axis=1)
    wctx = jnp.einsum('bs,bsd->bd', attn, context_t)            # (B, D)
    return jnp.tanh(wctx @ w_context.T + query @ w_query.T)


if __name__ == "__main__":
    def _run_case(case, B, S, D, dtype=jnp.float32, tol=1e-4,
                  alignment_function="general", **kw):
        key = jax.random.fold_in(jax.random.PRNGKey(0), case)
        k1, k2, k3, k4, k5, k6 = jax.random.split(key, 6)
        query = jax.random.normal(k1, (B, D), dtype=jnp.float32).astype(dtype)
        context = jax.random.normal(k2, (S, B, D), dtype=jnp.float32).astype(dtype)
        # mask: 1 -> masked out; keep at least one unmasked position per row
        mask = (jax.random.uniform(k3, (B, S)) < 0.3).astype(jnp.int32)
        mask = mask.at[:, 0].set(0)
        # nn.Linear(dim, dim, bias=False) weights, PyTorch layout (out, in)
        scale = 1.0 / float(D) ** 0.5
        w_align = jax.random.uniform(k4, (D, D), minval=-scale, maxval=scale).astype(dtype)
        w_context = jax.random.uniform(k5, (D, D), minval=-scale, maxval=scale).astype(dtype)
        w_query = jax.random.uniform(k6, (D, D), minval=-scale, maxval=scale).astype(dtype)

        out = global_attention(query, context, mask, w_align, w_context, w_query,
                               alignment_function=alignment_function, **kw)
        out = jax.block_until_ready(out)
        assert out.shape == (B, D) and out.dtype == dtype

        f32 = jnp.float32
        ref = _reference(query.astype(f32), context.astype(f32), mask,
                         w_align.astype(f32), w_context.astype(f32),
                         w_query.astype(f32), alignment_function)
        err = float(jnp.max(jnp.abs(out.astype(f32) - ref)))
        assert err <= tol, f"case {case}: max err {err} > tol {tol}"

    # 1. Small single-tile case (B, D below the 8x128 tile; full-extent blocks, no HBM padding).
    _run_case(0, B=2, S=8, D=32)
    # 2. Multi-tile path: 2 batch tiles (megacore) x 3 sequence tiles (online softmax across S).
    _run_case(1, B=16, S=384, D=128, block_b=8, block_s=128)
    # 3. 'dot' alignment: W_align input skipped entirely.
    _run_case(2, B=2, S=8, D=32, alignment_function="dot")
    # 4. bf16 streaming + ragged tails: B=12 (batch-tile overhang), S=100 (sequence-tile
    #    overhang handled in-kernel via the mask; no HBM pad copy of the context).
    _run_case(3, B=12, S=100, D=128, dtype=jnp.bfloat16, tol=7.5e-2,
              block_b=8, block_s=32)

    print("KERNEL_OK")
</pallas_src>

<mosaic_0001>
module attributes {stable_mosaic.version = 11 : i64} {
  func.func @kernel(%arg0: i32, %arg1: i32, %arg2: memref<2x32xf32, #tpu.memory_space<vmem>>, %arg3: memref<8x2x32xf32, #tpu.memory_space<vmem>>, %arg4: memref<1x8x2xi32, #tpu.memory_space<vmem>>, %arg5: memref<32x32xf32, #tpu.memory_space<vmem>>, %arg6: memref<64x32xf32, #tpu.memory_space<vmem>>, %arg7: memref<2x32xf32, #tpu.memory_space<vmem>>, %arg8: memref<2x32xf32, #tpu.memory_space<vmem>>, %arg9: memref<1x2xf32, #tpu.memory_space<vmem>>, %arg10: memref<1x2xf32, #tpu.memory_space<vmem>>, %arg11: memref<2x32xf32, #tpu.memory_space<vmem>>) attributes {dimension_semantics = [#tpu.dimension_semantics<parallel>, #tpu.dimension_semantics<arbitrary>], iteration_bounds = array<i64: 1, 1>, scalar_prefetch = 0 : i64, scratch_operands = 4 : i64, tpu.core_type = #tpu.core_type<tc>, window_params = [{transform_indices = @transform_0, window_bounds = array<i64: 2, 32>}, {transform_indices = @transform_1, window_bounds = array<i64: 8, 2, 32>}, {transform_indices = @transform_2, window_bounds = array<i64: 1, 8, 2>}, {pipeline_mode = #tpu.pipeline_mode<synchronous>, transform_indices = @transform_3, window_bounds = array<i64: 32, 32>}, {pipeline_mode = #tpu.pipeline_mode<synchronous>, transform_indices = @transform_4, window_bounds = array<i64: 64, 32>}, {transform_indices = @transform_5, window_bounds = array<i64: 2, 32>}]} {
    %c0_i32 = arith.constant 0 : i32
    %0 = arith.cmpi eq, %arg1, %c0_i32 : i32
    %1 = arith.extui %0 : i1 to i32
    %c0_i32_0 = arith.constant 0 : i32
    %2 = arith.cmpi ne, %1, %c0_i32_0 : i32
    scf.if %2 {
      %c0_27 = arith.constant 0 : index
      %c0_28 = arith.constant 0 : index
      %46 = vector.load %arg2[%c0_27, %c0_28] : memref<2x32xf32, #tpu.memory_space<vmem>>, vector<2x32xf32>
      %c0_29 = arith.constant 0 : index
      %c0_30 = arith.constant 0 : index
      %47 = vector.load %arg5[%c0_29, %c0_30] : memref<32x32xf32, #tpu.memory_space<vmem>>, vector<32x32xf32>
      %cst_31 = arith.constant dense<0.000000e+00> : vector<2x32xf32>
      %48 = tpu.matmul %46, %47, %cst_31 {dimension_numbers = #tpu.dot_dimension_numbers<[1], [0], [0], [1], [0, 0, 1, 1], [], []>} : vector<2x32xf32>, vector<32x32xf32>, vector<2x32xf32> -> vector<2x32xf32>
      %c0_32 = arith.constant 0 : index
      %c0_33 = arith.constant 0 : index
      %49 = vector.load %arg8[%c0_32, %c0_33] : memref<2x32xf32, #tpu.memory_space<vmem>>, vector<2x32xf32>
      tpu.vector_store %arg8[%c0_32, %c0_33], %48 {strides = array<i32>} : memref<2x32xf32, #tpu.memory_space<vmem>>, vector<2x32xf32>,
      %cst_34 = arith.constant -1.000000e+30 : f32
      %50 = vector.broadcast %cst_34 : f32 to vector<1x2xf32>
      %c0_35 = arith.constant 0 : index
      %c0_36 = arith.constant 0 : index
      %51 = vector.load %arg9[%c0_35, %c0_36] : memref<1x2xf32, #tpu.memory_space<vmem>>, vector<1x2xf32>
      tpu.vector_store %arg9[%c0_35, %c0_36], %50 {strides = array<i32>} : memref<1x2xf32, #tpu.memory_space<vmem>>, vector<1x2xf32>,
      %cst_37 = arith.constant 0.000000e+00 : f32
      %52 = vector.broadcast %cst_37 : f32 to vector<1x2xf32>
      %c0_38 = arith.constant 0 : index
      %c0_39 = arith.constant 0 : index
      %53 = vector.load %arg10[%c0_38, %c0_39] : memref<1x2xf32, #tpu.memory_space<vmem>>, vector<1x2xf32>
      tpu.vector_store %arg10[%c0_38, %c0_39], %52 {strides = array<i32>} : memref<1x2xf32, #tpu.memory_space<vmem>>, vector<1x2xf32>,
      %cst_40 = arith.constant 0.000000e+00 : f32
      %54 = vector.broadcast %cst_40 : f32 to vector<2x32xf32>
      %c0_41 = arith.constant 0 : index
      %c0_42 = arith.constant 0 : index
      %55 = vector.load %arg11[%c0_41, %c0_42] : memref<2x32xf32, #tpu.memory_space<vmem>>, vector<2x32xf32>
      tpu.vector_store %arg11[%c0_41, %c0_42], %54 {strides = array<i32>} : memref<2x32xf32, #tpu.memory_space<vmem>>, vector<2x32xf32>,
    } else {
    }
    %c0 = arith.constant 0 : index
    %c0_1 = arith.constant 0 : index
    %c0_2 = arith.constant 0 : index
    %3 = vector.load %arg3[%c0, %c0_1, %c0_2] : memref<8x2x32xf32, #tpu.memory_space<vmem>>, vector<8x2x32xf32>
    %c0_3 = arith.constant 0 : index
    %c0_4 = arith.constant 0 : index
    %c0_5 = arith.constant 0 : index
    %4 = vector.load %arg4[%c0_3, %c0_4, %c0_5] : memref<1x8x2xi32, #tpu.memory_space<vmem>>, vector<1x8x2xi32>
    %5 = vector.shape_cast %4 : vector<1x8x2xi32> to vector<8x2xi32>
    %c0_6 = arith.constant 0 : index
    %c0_7 = arith.constant 0 : index
    %6 = vector.load %arg8[%c0_6, %c0_7] : memref<2x32xf32, #tpu.memory_space<vmem>>, vector<2x32xf32>
    %7 = vector.shape_cast %6 : vector<2x32xf32> to vector<1x2x32xf32>
    %8 = vector.broadcast %7 : vector<1x2x32xf32> to vector<8x2x32xf32>
    %9 = arith.mulf %3, %8 : vector<8x2x32xf32>
    %cst = arith.constant dense<0.000000e+00> : vector<8x2xf32>
    %10 = vector.multi_reduction <add>, %9, %cst [2] : vector<8x2x32xf32> to vector<8x2xf32>
    %c0_i32_8 = arith.constant 0 : i32
    %11 = vector.broadcast %c0_i32_8 : i32 to vector<8x2xi32>
    %12 = arith.cmpi ne, %5, %11 : vector<8x2xi32>
    %cst_9 = arith.constant -1.000000e+30 : f32
    %13 = vector.broadcast %cst_9 : f32 to vector<8x2xf32>
    %14 = arith.select %12, %13, %10 : vector<8x2xi1>, vector<8x2xf32>
    %c0_10 = arith.constant 0 : index
    %c0_11 = arith.constant 0 : index
    %15 = vector.load %arg9[%c0_10, %c0_11] : memref<1x2xf32, #tpu.memory_space<vmem>>, vector<1x2xf32>
    %cst_12 = arith.constant dense<0xFF800000> : vector<2xf32>
    %16 = vector.multi_reduction <maximumf>, %14, %cst_12 [0] : vector<8x2xf32> to vector<2xf32>
    %17 = vector.shape_cast %16 : vector<2xf32> to vector<1x2xf32>
    %18 = arith.maximumf %15, %17 : vector<1x2xf32>
    %19 = arith.subf %15, %18 : vector<1x2xf32>
    %20 = math.exp %19 : vector<1x2xf32>
    %21 = vector.broadcast %18 : vector<1x2xf32> to vector<8x2xf32>
    %22 = arith.subf %14, %21 : vector<8x2xf32>
    %23 = math.exp %22 : vector<8x2xf32>
    %c0_13 = arith.constant 0 : index
    %c0_14 = arith.constant 0 : index
    %24 = vector.load %arg9[%c0_13, %c0_14] : memref<1x2xf32, #tpu.memory_space<vmem>>, vector<1x2xf32>
    tpu.vector_store %arg9[%c0_13, %c0_14], %18 {strides = array<i32>} : memref<1x2xf32, #tpu.memory_space<vmem>>, vector<1x2xf32>,
    %c0_15 = arith.constant 0 : index
    %c0_16 = arith.constant 0 : index
    %25 = vector.load %arg10[%c0_15, %c0_16] : memref<1x2xf32, #tpu.memory_space<vmem>>, vector<1x2xf32>
    %26 = arith.mulf %20, %25 : vector<1x2xf32>
    %cst_17 = arith.constant dense<0.000000e+00> : vector<2xf32>
    %27 = vector.multi_reduction <add>, %23, %cst_17 [0] : vector<8x2xf32> to vector<2xf32>
    %28 = vector.shape_cast %27 : vector<2xf32> to vector<1x2xf32>
    %29 = arith.addf %26, %28 : vector<1x2xf32>
    %c0_18 = arith.constant 0 : index
    %c0_19 = arith.constant 0 : index
    %30 = vector.load %arg10[%c0_18, %c0_19] : memref<1x2xf32, #tpu.memory_space<vmem>>, vector<1x2xf32>
    tpu.vector_store %arg10[%c0_18, %c0_19], %29 {strides = array<i32>} : memref<1x2xf32, #tpu.memory_space<vmem>>, vector<1x2xf32>,
    %31 = vector.shape_cast %23 : vector<8x2xf32> to vector<8x2x1xf32>
    %32 = vector.broadcast %31 : vector<8x2x1xf32> to vector<8x2x32xf32>
    %33 = arith.mulf %32, %3 : vector<8x2x32xf32>
    %cst_20 = arith.constant dense<0.000000e+00> : vector<2x32xf32>
    %34 = vector.multi_reduction <add>, %33, %cst_20 [0] : vector<8x2x32xf32> to vector<2x32xf32>
    %35 = vector.shape_cast %20 : vector<1x2xf32> to vector<1x2x1xf32>
    %c0_21 = arith.constant 0 : index
    %c0_22 = arith.constant 0 : index
    %36 = vector.load %arg11[%c0_21, %c0_22] : memref<2x32xf32, #tpu.memory_space<vmem>>, vector<2x32xf32>
    %37 = vector.shape_cast %36 : vector<2x32xf32> to vector<1x2x32xf32>
    %38 = vector.broadcast %35 : vector<1x2x1xf32> to vector<1x2x32xf32>
    %39 = arith.mulf %38, %37 : vector<1x2x32xf32>
    %40 = vector.shape_cast %39 : vector<1x2x32xf32> to vector<2x32xf32>
    %41 = arith.addf %40, %34 : vector<2x32xf32>
    %c0_23 = arith.constant 0 : index
    %c0_24 = arith.constant 0 : index
    %42 = vector.load %arg11[%c0_23, %c0_24] : memref<2x32xf32, #tpu.memory_space<vmem>>, vector<2x32xf32>
    tpu.vector_store %arg11[%c0_23, %c0_24], %41 {strides = array<i32>} : memref<2x32xf32, #tpu.memory_space<vmem>>, vector<2x32xf32>,
    %c0_i32_25 = arith.constant 0 : i32
    %43 = arith.cmpi eq, %arg1, %c0_i32_25 : i32
    %44 = arith.extui %43 : i1 to i32
    %c0_i32_26 = arith.constant 0 : i32
    %45 = arith.cmpi ne, %44, %c0_i32_26 : i32
    scf.if %45 {
      %c0_27 = arith.constant 0 : index
      %c0_28 = arith.constant 0 : index
      %46 = vector.load %arg10[%c0_27, %c0_28] : memref<1x2xf32, #tpu.memory_space<vmem>>, vector<1x2xf32>
      %47 = tpu.reciprocal %46 {approx = true} : vector<1x2xf32> -> vector<1x2xf32>
      %48 = arith.mulf %46, %47 : vector<1x2xf32>
      %cst_29 = arith.constant 2.000000e+00 : f32
      %49 = vector.broadcast %cst_29 : f32 to vector<1x2xf32>
      %50 = arith.subf %49, %48 : vector<1x2xf32>
      %51 = arith.mulf %47, %50 : vector<1x2xf32>
      %52 = vector.shape_cast %51 : vector<1x2xf32> to vector<1x2x1xf32>
      %c0_30 = arith.constant 0 : index
      %c0_31 = arith.constant 0 : index
      %53 = vector.load %arg11[%c0_30, %c0_31] : memref<2x32xf32, #tpu.memory_space<vmem>>, vector<2x32xf32>
      %54 = vector.shape_cast %53 : vector<2x32xf32> to vector<1x2x32xf32>
      %55 = vector.broadcast %52 : vector<1x2x1xf32> to vector<1x2x32xf32>
      %56 = arith.mulf %55, %54 : vector<1x2x32xf32>
      %57 = vector.shape_cast %56 : vector<1x2x32xf32> to vector<2x32xf32>
      %c0_32 = arith.constant 0 : index
      %c0_33 = arith.constant 0 : index
      %58 = vector.load %arg2[%c0_32, %c0_33] : memref<2x32xf32, #tpu.memory_space<vmem>>, vector<2x32xf32>
      %59 = tpu.concatenate %57, %58 in 1 : vector<2x32xf32>, vector<2x32xf32> -> vector<2x64xf32>
      %c0_34 = arith.constant 0 : index
      %c0_35 = arith.constant 0 : index
      %60 = vector.load %arg6[%c0_34, %c0_35] : memref<64x32xf32, #tpu.memory_space<vmem>>, vector<64x32xf32>
      %cst_36 = arith.constant dense<0.000000e+00> : vector<2x32xf32>
      %61 = tpu.matmul %59, %60, %cst_36 {dimension_numbers = #tpu.dot_dimension_numbers<[1], [0], [0], [1], [0, 0, 1, 1], [], []>} : vector<2x64xf32>, vector<64x32xf32>, vector<2x32xf32> -> vector<2x32xf32>
      %62 = math.tanh %61 : vector<2x32xf32>
      %c0_37 = arith.constant 0 : index
      %c0_38 = arith.constant 0 : index
      %63 = vector.load %arg7[%c0_37, %c0_38] : memref<2x32xf32, #tpu.memory_space<vmem>>, vector<2x32xf32>
      tpu.vector_store %arg7[%c0_37, %c0_38], %62 {strides = array<i32>} : memref<2x32xf32, #tpu.memory_space<vmem>>, vector<2x32xf32>,
    } else {
    }
    return
  }
  func.func @transform_0(%arg0: i32, %arg1: i32) -> (i32, i32) {
    %c0_i32 = arith.constant 0 : i32
    %c0_i32_0 = arith.constant 0 : i32
    return %arg0, %c0_i32 : i32, i32
  }
  func.func @transform_1(%arg0: i32, %arg1: i32) -> (i32, i32, i32) {
    %c0_i32 = arith.constant 0 : i32
    %c0_i32_0 = arith.constant 0 : i32
    return %arg1, %arg0, %c0_i32 : i32, i32, i32
  }
  func.func @transform_2(%arg0: i32, %arg1: i32) -> (i32, i32, i32) {
    %c0_i32 = arith.constant 0 : i32
    %c0_i32_0 = arith.constant 0 : i32
    return %arg0, %arg1, %c0_i32 : i32, i32, i32
  }
  func.func @transform_3(%arg0: i32, %arg1: i32) -> (i32, i32) {
    %c0_i32 = arith.constant 0 : i32
    %c0_i32_0 = arith.constant 0 : i32
    %c0_i32_1 = arith.constant 0 : i32
    return %c0_i32, %c0_i32_0 : i32, i32
  }
  func.func @transform_4(%arg0: i32, %arg1: i32) -> (i32, i32) {
    %c0_i32 = arith.constant 0 : i32
    %c0_i32_0 = arith.constant 0 : i32
    %c0_i32_1 = arith.constant 0 : i32
    return %c0_i32, %c0_i32_0 : i32, i32
  }
  func.func @transform_5(%arg0: i32, %arg1: i32) -> (i32, i32) {
    %c0_i32 = arith.constant 0 : i32
    %c0_i32_0 = arith.constant 0 : i32
    return %arg0, %c0_i32 : i32, i32
  }
}

</mosaic_0001>

<llo_original>
// kernel: tpu_custom_call.1
$region0: #{tpu_custom_call.1}
  #allocation0 [shape = 'u32[]', space=smem, size = 0x4, offset = 0x4, fixed_abs, tag = 'smem constant byte address 0x4 - core index']
  #allocation1 [shape = 'u32[72,128]{1,0:T(1,128)}', space=vmem, size = 0x9000, scoped, tag = 'internal scratch']
  #allocation2 [shape = 'f32[2,32]{1,0:T(2,128)}', space=vmem, size = 0x400, scoped, tag = 'scratch operand']
  #allocation3 [shape = 'f32[1,2]{1,0:T(1,128)}', space=vmem, size = 0x200, scoped, tag = 'scratch operand']
  #allocation4 [shape = 'f32[1,2]{1,0:T(1,128)}', space=vmem, size = 0x200, scoped, tag = 'scratch operand']
  #allocation5 [shape = 'f32[2,32]{1,0:T(2,128)}', space=vmem, size = 0x400, scoped, tag = 'scratch operand']
  %s0 = inlined_call_operand.vmem [shape: f32[2,32], index: 0, kind: input, shape index: {}]
  %s1 = inlined_call_operand.vmem [shape: f32[8,2,32], index: 1, kind: input, shape index: {}]
  %s2 = inlined_call_operand.vmem [shape: s32[1,8,2], index: 2, kind: input, shape index: {}]
  %s3 = inlined_call_operand.vmem [shape: f32[32,32], index: 3, kind: input, shape index: {}]
  %s4 = inlined_call_operand.vmem [shape: f32[64,32], index: 4, kind: input, shape index: {}]
  %s5 = inlined_call_operand.hbm [shape: f32[2,32], index: 5, kind: output, shape index: {}]
  %s6 = sld [smem:[#allocation0]]
  $region38: #{tpu_custom_call.1} parent=0
    _
  %s8 = ssub.s32 1, %s6
  %s9 = scalar_select 0, %s8, %s6
  $region1: #{tpu_custom_call.1} parent=0
    #allocation6 [shape = 'u8[1024]{0}', space=vmem, size = 0x400, scoped, tag = 'output window, operand 0, single buffered']
    #allocation7 [shape = 's32[1]{0}', space=sflag, size = 0x4, scoped, tag = 'scoped memory for tpu_custom_call.1']
    %10 = vsyncpa [#allocation7], 0
    // Predicated region
    $region2: #{tpu_custom_call.1} parent=1 // pred_check
      _
    $region3: #{tpu_custom_call.1} parent=1 // pred_check_branch
      %12 = sbr.rel (0) target = $region5
    $region4: #{tpu_custom_call.1} parent=1 // pred_region
      _
    $region5: #{tpu_custom_call.1} parent=1 // pred_fallthru
      _
    // Predicated region
    $region6: #{tpu_custom_call.1} parent=1 // pred_check
      _
    $region7: #{tpu_custom_call.1} parent=1 // pred_check_branch
      %14 = sbr.rel (0) target = $region9
    $region8: #{tpu_custom_call.1} parent=1 // pred_region
      _
    $region9: #{tpu_custom_call.1} parent=1 // pred_fallthru
      _
    // Predicated region
    $region10: #{tpu_custom_call.1} parent=1 // pred_check
      _
    $region11: #{tpu_custom_call.1} parent=1 // pred_check_branch
      %16 = sbr.rel (0) target = $region13
    $region12: #{tpu_custom_call.1} parent=1 // pred_region
      _
    $region13: #{tpu_custom_call.1} parent=1 // pred_fallthru
      _
    // Predicated region
    $region14: #{tpu_custom_call.1} parent=1 // pred_check
      _
    $region15: #{tpu_custom_call.1} parent=1 // pred_check_branch
      %18 = sbr.rel (0) target = $region17
    $region16: #{tpu_custom_call.1} parent=1 // pred_region
      _
    $region17: #{tpu_custom_call.1} parent=1 // pred_fallthru
      _
    // Predicated region
    $region18: #{tpu_custom_call.1} parent=1 // pred_check
      _
    $region19: #{tpu_custom_call.1} parent=1 // pred_check_branch
      %20 = sbr.rel (0) target = $region21
    $region20: #{tpu_custom_call.1} parent=1 // pred_region
      _
    $region21: #{tpu_custom_call.1} parent=1 // pred_fallthru
      _
    %p21 = scmp.eq.s32.totalorder 0, 0
    // Predicated region
    $region22: #{tpu_custom_call.1} parent=1 // pred_check
      %p22 = pneg %p21
    $region23: #{tpu_custom_call.1} parent=1 // pred_check_branch
      %24 = sbr.rel (%p22) target = $region25
    $region24: #{tpu_custom_call.1} parent=1 // pred_region
      %v25 = vld [vmem:[%s0] sm:$0x3]
      %v26 = vld [vmem:[%s3] sm:$0xff]
      %v27 = vld [vmem:[%s3 + $0x8] sm:$0xff]
      %v28 = vld [vmem:[%s3 + $0x10] sm:$0xff]
      %v29 = vld [vmem:[%s3 + $0x18] sm:$0xff]
      %vm30 = vcmask 261120
      %v32 = vsel %vm30, %v25, 0
      %34 = vmatpush.msra.mxu0 0.0
      %35 = vmatpush.msra.mxu0 0.0
      %36 = vmatpush.msra.mxu0 0.0
      %37 = vmatpush.msra.mxu0 0.0
      %38 = vmatpush.msra.mxu0 0.0
      %39 = vmatpush.msra.mxu0 0.0
      %40 = vmatpush.msra.mxu0 0.0
      %41 = vmatpush.msra.mxu0 0.0
      %42 = vmatpush.msra.mxu0 0.0
      %43 = vmatpush.msra.mxu0 0.0
      %44 = vmatpush.msra.mxu0 0.0
      %45 = vmatpush.msra.mxu0 0.0
      %46 = vmatpush.msra.mxu0 %v29
      %47 = vmatpush.msra.mxu0 %v28
      %48 = vmatpush.msra.mxu0 %v27
      %49 = vmatpush.msra.mxu0 %v26
      %50 = vmatmul.f32.gmra.mxu0 %v32
      %v51 = vpop.f32.mrf.mxu0
      %v52 = vadd.f32 0.0, %v51
      %53 = vdwg.mxu0
      %vm54 = vcmask 254976
      %55 = vst.msk [vmem:[#allocation2] sm:$0x3] %vm54, %v52
      %vm56 = vcmask 8192
      %57 = vst.msk [vmem:[#allocation3] sm:$0x1] %vm56, -1e+30
      %58 = vst.msk [vmem:[#allocation4] sm:$0x1] %vm56, 0.0
      %59 = vst.msk [vmem:[#allocation5] sm:$0x3] %vm54, 0.0
    $region25: #{tpu_custom_call.1} parent=1 // pred_fallthru
      _
    %v60 = vld [vmem:[%s1] sm:$0x3]
    %v61 = vld [vmem:[%s1 + $0x2] sm:$0x3]
    %v62 = vld [vmem:[%s1 + $0x4] sm:$0x3]
    %v63 = vld [vmem:[%s1 + $0x6] sm:$0x3]
    %v64 = vld [vmem:[%s1 + $0x8] sm:$0x3]
    %v65 = vld [vmem:[%s1 + $0xa] sm:$0x3]
    %v66 = vld [vmem:[%s1 + $0xc] sm:$0x3]
    %v67 = vld [vmem:[%s1 + $0xe] sm:$0x3]
    %v68 = vld [vmem:[%s2] sm:$0xff]
    %v69 = vld [vmem:[#allocation2] sm:$0x3]
    %v70 = vmul.f32 %v60, %v69
    %v71 = vmul.f32 %v61, %v69
    %v72 = vmul.f32 %v62, %v69
    %v73 = vmul.f32 %v63, %v69
    %v74 = vmul.f32 %v64, %v69
    %v75 = vmul.f32 %v65, %v69
    %v76 = vmul.f32 %v66, %v69
    %v77 = vmul.f32 %v67, %v69
    %vm78 = vcmask 254976
    %v79 = vsel %vm78, %v70, 0.0
    %80 = vadd.xlane.f32.xlu0 %v79
    %v81 = vpop.xlane.xlu0 %80
    %v82 = vsel %vm78, %v71, 0.0
    %83 = vadd.xlane.f32.xlu0 %v82
    %v84 = vpop.xlane.xlu0 %83
    %v85 = vsel %vm78, %v72, 0.0
    %86 = vadd.xlane.f32.xlu0 %v85
    %v87 = vpop.xlane.xlu0 %86
    %v88 = vsel %vm78, %v73, 0.0
    %89 = vadd.xlane.f32.xlu0 %v88
    %v90 = vpop.xlane.xlu0 %89
    %v91 = vsel %vm78, %v74, 0.0
    %92 = vadd.xlane.f32.xlu0 %v91
    %v93 = vpop.xlane.xlu0 %92
    %v94 = vsel %vm78, %v75, 0.0
    %95 = vadd.xlane.f32.xlu0 %v94
    %v96 = vpop.xlane.xlu0 %95
    %v97 = vsel %vm78, %v76, 0.0
    %98 = vadd.xlane.f32.xlu0 %v97
    %v99 = vpop.xlane.xlu0 %98
    %v100 = vsel %vm78, %v77, 0.0
    %101 = vadd.xlane.f32.xlu0 %v100
    %v102 = vpop.xlane.xlu0 %101
    %vm103 = vcmp.ne.s32.totalorder %v68, 0
    %v112 = vlaneseq
    %v113 = vand.u32 %v112, 127
    %v114 = vperm.slane %v81, %v113
    %v115 = vperm.slane %v84, %v113
    %v116 = vperm.slane %v87, %v113
    %v117 = vperm.slane %v90, %v113
    %v118 = vperm.slane %v93, %v113
    %v119 = vperm.slane %v96, %v113
    %v120 = vperm.slane %v99, %v113
    %v121 = vperm.slane %v102, %v113
    %vm122 = vcmask 1041409
    %v123 = vsel %vm122, %v115, %v114
    %vm124 = vcmask 1042434
    %v125 = vsel %vm124, %v116, %v123
    %vm126 = vcmask 1043459
    %v127 = vsel %vm126, %v117, %v125
    %vm128 = vcmask 1044484
    %v129 = vsel %vm128, %v118, %v127
    %vm130 = vcmask 1045509
    %v131 = vsel %vm130, %v119, %v129
    %vm132 = vcmask 1046534
    %v133 = vsel %vm132, %v120, %v131
    %vm134 = vcmask 1047559
    %v135 = vsel %vm134, %v121, %v133
    %v137 = vsel %vm103, -1e+30, %v135
    %v138 = vld [vmem:[#allocation3] sm:$0x1]
    %vm139 = vcmask 15360
    %v140 = vsel %vm139, %v137, -inf
    %v141 = vrot.slane %v140, 4
    %v142 = vmax.f32 %v140, %v141
    %v143 = vrot.slane %v142, 2
    %v144 = vmax.f32 %v142, %v143
    %v145 = vrot.slane %v144, 1
    %v146 = vmax.f32 %v144, %v145
    %v147 = vmax.f32 %v138, %v146
    %v148 = vsub.f32 %v138, %v147
    %v149 = vmul.f32 %v148, 1.442695
    %v150 = vpow.pop %v149
    %v152 = vperm.slane %v147, 0
    %v154 = vsub.f32 %v137, %v152
    %v155 = vmul.f32 %v154, 1.442695
    %v156 = vpow.pop %v155
    %vm157 = vcmask 8192
    %158 = vst.msk [vmem:[#allocation3] sm:$0x1] %vm157, %v147
    %v159 = vld [vmem:[#allocation4] sm:$0x1]
    %v160 = vmul.f32 %v150, %v159
    %v161 = vsel %vm139, %v156, 0.0
    %v162 = vrot.slane %v161, 4
    %v163 = vadd.f32 %v161, %v162
    %v164 = vrot.slane %v163, 2
    %v165 = vadd.f32 %v163, %v164
    %v166 = vrot.slane %v165, 1
    %v167 = vadd.f32 %v165, %v166
    %v168 = vadd.f32 %v160, %v167
    %169 = vst.msk [vmem:[#allocation4] sm:$0x1] %vm157, %v168
    %v170 = vperm.slane %v156, 0
    %v171 = vlaneseq
    %v172 = vshrl.u32 %v171, 7
    %174 = vset.pattern.permute.xlu0 %v172
    %175 = vperm.xlu0 %174, %v170
    %v176 = vpop.permute.xlu0 %175
    %v177 = vperm.slane %v156, 1
    %v178 = vlaneseq
    %v179 = vshrl.u32 %v178, 7
    %181 = vset.pattern.permute.xlu0 %v179
    %182 = vperm.xlu0 %181, %v177
    %v183 = vpop.permute.xlu0 %182
    %v184 = vperm.slane %v156, 2
    %v185 = vlaneseq
    %v186 = vshrl.u32 %v185, 7
    %188 = vset.pattern.permute.xlu0 %v186
    %189 = vperm.xlu0 %188, %v184
    %v190 = vpop.permute.xlu0 %189
    %v191 = vperm.slane %v156, 3
    %v192 = vlaneseq
    %v193 = vshrl.u32 %v192, 7
    %195 = vset.pattern.permute.xlu0 %v193
    %196 = vperm.xlu0 %195, %v191
    %v197 = vpop.permute.xlu0 %196
    %v198 = vperm.slane %v156, 4
    %v199 = vlaneseq
    %v200 = vshrl.u32 %v199, 7
    %202 = vset.pattern.permute.xlu0 %v200
    %203 = vperm.xlu0 %202, %v198
    %v204 = vpop.permute.xlu0 %203
    %v205 = vperm.slane %v156, 5
    %v206 = vlaneseq
    %v207 = vshrl.u32 %v206, 7
    %209 = vset.pattern.permute.xlu0 %v207
    %210 = vperm.xlu0 %209, %v205
    %v211 = vpop.permute.xlu0 %210
    %v212 = vperm.slane %v156, 6
    %v213 = vlaneseq
    %v214 = vshrl.u32 %v213, 7
    %216 = vset.pattern.permute.xlu0 %v214
    %217 = vperm.xlu0 %216, %v212
    %v218 = vpop.permute.xlu0 %217
    %v219 = vperm.slane %v156, 7
    %v220 = vlaneseq
    %v221 = vshrl.u32 %v220, 7
    %223 = vset.pattern.permute.xlu0 %v221
    %224 = vperm.xlu0 %223, %v219
    %v225 = vpop.permute.xlu0 %224
    %v226 = vmul.f32 %v176, %v60
    %v227 = vmul.f32 %v183, %v61
    %v228 = vmul.f32 %v190, %v62
    %v229 = vmul.f32 %v197, %v63
    %v230 = vmul.f32 %v204, %v64
    %v231 = vmul.f32 %v211, %v65
    %v232 = vmul.f32 %v218, %v66
    %v233 = vmul.f32 %v225, %v67
    %v234 = vsel %vm78, %v226, 0.0
    %v235 = vsel %vm78, %v227, 0.0
    %v236 = vadd.f32 %v234, %v235
    %v237 = vsel %vm78, %v228, 0.0
    %v238 = vadd.f32 %v236, %v237
    %v239 = vsel %vm78, %v229, 0.0
    %v240 = vadd.f32 %v238, %v239
    %v241 = vsel %vm78, %v230, 0.0
    %v242 = vadd.f32 %v240, %v241
    %v243 = vsel %vm78, %v231, 0.0
    %v244 = vadd.f32 %v242, %v243
    %v245 = vsel %vm78, %v232, 0.0
    %v246 = vadd.f32 %v244, %v245
    %v247 = vsel %vm78, %v233, 0.0
    %v248 = vadd.f32 %v246, %v247
    %v249 = vperm.slane %v150, 0
    %v250 = vlaneseq
    %v251 = vshrl.u32 %v250, 7
    %253 = vset.pattern.permute.xlu0 %v251
    %254 = vperm.xlu0 %253, %v249
    %v255 = vpop.permute.xlu0 %254
    %v256 = vld [vmem:[#allocation5] sm:$0x3]
    %v257 = vmul.f32 %v255, %v256
    %v258 = vadd.f32 %v257, %v248
    %259 = vst.msk [vmem:[#allocation5] sm:$0x3] %vm78, %v258
    // Predicated region
    $region26: #{tpu_custom_call.1} parent=1 // pred_check
      %p260 = pneg %p21
    $region27: #{tpu_custom_call.1} parent=1 // pred_check_branch
      %262 = sbr.rel (%p260) target = $region29
    $region28: #{tpu_custom_call.1} parent=1 // pred_region
      %v263 = vld [vmem:[#allocation4] sm:$0x1]
      %v264 = vrcp.pop %v263
      %v265 = vmul.f32 %v263, %v264
      %v266 = vsub.f32 2.0, %v265
      %v267 = vmul.f32 %v264, %v266
      %v268 = vperm.slane %v267, 0
      %v269 = vlaneseq
      %v270 = vshrl.u32 %v269, 7
      %272 = vset.pattern.permute.xlu0 %v270
      %273 = vperm.xlu0 %272, %v268
      %v274 = vpop.permute.xlu0 %273
      %v275 = vld [vmem:[#allocation5] sm:$0x3]
      %v276 = vmul.f32 %v274, %v275
      %v277 = vld [vmem:[%s0] sm:$0x3]
      %279 = vrot.lane.b32.xlu0 %v277, 32
      %v280 = vpop.permute.xlu0 %279
      %vm282 = vcmask 261120
      %v283 = vsel %vm282, %v276, %v280
      %v284 = vld [vmem:[%s4] sm:$0xff]
      %v285 = vld [vmem:[%s4 + $0x8] sm:$0xff]
      %v286 = vld [vmem:[%s4 + $0x10] sm:$0xff]
      %v287 = vld [vmem:[%s4 + $0x18] sm:$0xff]
      %v288 = vld [vmem:[%s4 + $0x20] sm:$0xff]
      %v289 = vld [vmem:[%s4 + $0x28] sm:$0xff]
      %v290 = vld [vmem:[%s4 + $0x30] sm:$0xff]
      %v291 = vld [vmem:[%s4 + $0x38] sm:$0xff]
      %vm292 = vcmask 523264
      %v294 = vsel %vm292, %v283, 0
      %296 = vmatpush.msra.mxu0 0.0
      %297 = vmatpush.msra.mxu0 0.0
      %298 = vmatpush.msra.mxu0 0.0
      %299 = vmatpush.msra.mxu0 0.0
      %300 = vmatpush.msra.mxu0 0.0
      %301 = vmatpush.msra.mxu0 0.0
      %302 = vmatpush.msra.mxu0 0.0
      %303 = vmatpush.msra.mxu0 0.0
      %304 = vmatpush.msra.mxu0 %v291
      %305 = vmatpush.msra.mxu0 %v290
      %306 = vmatpush.msra.mxu0 %v289
      %307 = vmatpush.msra.mxu0 %v288
      %308 = vmatpush.msra.mxu0 %v287
      %309 = vmatpush.msra.mxu0 %v286
      %310 = vmatpush.msra.mxu0 %v285
      %311 = vmatpush.msra.mxu0 %v284
      %312 = vmatmul.f32.gmra.mxu0 %v294
      %v313 = vpop.f32.mrf.mxu0
      %v314 = vadd.f32 0.0, %v313
      %315 = vdwg.mxu0
      %v316 = vtanh.pop %v314
      %317 = vst.msk [vmem:[#allocation6] sm:$0x3] %vm78, %v316
    $region29: #{tpu_custom_call.1} parent=1 // pred_fallthru
      _
    // Predicated region
    $region30: #{tpu_custom_call.1} parent=1 // pred_check
      _
    $region31: #{tpu_custom_call.1} parent=1 // pred_check_branch
      %319 = sbr.rel (0) target = $region33
    $region32: #{tpu_custom_call.1} parent=1 // pred_region
      %321 = vsyncadd [#allocation7], 0
      %s323 = sshll.u32 [#allocation6], 4
      %s324 = int_to_ptr.vmem [resolvable:$true] %s323
      %s325 = sshll.u32 %s5, 4
      %s326 = int_to_ptr.hbm [resolvable:$true] %s325
      %328 = dma.vmem_to_hbm [thread:$0]  %s324, 32, %s326, [#allocation7]
    $region33: #{tpu_custom_call.1} parent=1 // pred_fallthru
      _
    // Predicated region
    $region34: #{tpu_custom_call.1} parent=1 // pred_check
      _
    $region35: #{tpu_custom_call.1} parent=1 // pred_check_branch
      %330 = sbr.rel (0) target = $region37
    $region36: #{tpu_custom_call.1} parent=1 // pred_region
      %332 = dma.done [#allocation7], 32
    $region37: #{tpu_custom_call.1} parent=1 // pred_fallthru
      _
    %333 = vsyncpa [#allocation7], 1

</llo_original>
